<compile_context>
chip_gen: v6e
topology: v6e:2x2x1
jax: 0.10.0
libtpu: 0.0.40
codegen_flags: <defaults>
</compile_context>

<pallas_src>
import functools

import numpy as np

import jax
import jax.numpy as jnp
from jax.experimental import pallas as pl
from jax.experimental.pallas import tpu as pltpu


# ---------------------------------------------------------------------------
# Constant banded averaging matrix (folds replicate padding + AvgPool1d).
# ---------------------------------------------------------------------------
def _band_matrix(seq_len, kernel_size, stride):
    """W such that moving_avg(x)[b, t, c] == sum_i W[t, i] * x[b, i, c]."""
    pad = (kernel_size - 1) // 2
    padded_len = seq_len + 2 * pad
    out_len = (padded_len - kernel_size) // stride + 1
    if out_len < 1:
        raise ValueError("kernel_size too large for this sequence length")
    src = np.clip(np.arange(padded_len) - pad, 0, seq_len - 1)   # replicate pad
    w = np.zeros((out_len, seq_len), dtype=np.float32)
    inv_k = 1.0 / float(kernel_size)
    for t in range(out_len):
        for j in range(t * stride, t * stride + kernel_size):
            w[t, src[j]] += inv_k
    return w, out_len


def _pick_time_tile(out_len, channels, batch):
    """Divisor-of-out_len tile for the output-time axis.

    Keeps each output block a modest size and, when the batch alone would give
    too few grid steps, splits time so the pipeline (and v7x's 2 TensorCores)
    get several steps to overlap / shard.
    """
    if out_len % 8 != 0:              # sublane rule: tile must be a multiple of
        return out_len                # 8 or the full axis -> don't tile.
    divisors = [d for d in range(8, out_len + 1, 8) if out_len % d == 0]
    block_budget = 2 * 1024 * 1024                       # ~2 MiB f32 per block
    fits = [d for d in divisors if d * channels * 4 <= block_budget]
    tile = max(fits) if fits else divisors[0]
    while batch * (out_len // tile) < 8:                  # want >= 8 grid steps
        smaller = [d for d in divisors
                   if d < tile and d * channels * 4 >= 64 * 1024]
        if not smaller:
            break
        tile = max(smaller)
    return tile


# ---------------------------------------------------------------------------
# Kernels
# ---------------------------------------------------------------------------
def _moving_avg_kernel(w_ref, x_ref, mean_ref):
    # w_ref: (Tt, L) f32    x_ref: (L, C)    mean_ref: (Tt, C)
    xf = x_ref[...].astype(jnp.float32)                     # one upcast / block
    mean = jnp.dot(w_ref[...], xf,
                   preferred_element_type=jnp.float32,
                   precision=jax.lax.Precision.HIGHEST)     # MXU band contraction
    mean_ref[...] = mean.astype(mean_ref.dtype)


def _series_decomp_kernel(w_ref, x_ref, mean_ref, res_ref, *, time_tile, seq_len):
    # Fused Autoformer series_decomp: trend = W @ x, seasonal = x - trend.
    xf = x_ref[...].astype(jnp.float32)                     # (L, C)
    mean = jnp.dot(w_ref[...], xf,
                   preferred_element_type=jnp.float32,
                   precision=jax.lax.Precision.HIGHEST)     # (Tt, C)
    mean_ref[...] = mean.astype(mean_ref.dtype)
    if time_tile == seq_len:
        xs = xf
    else:
        t0 = pl.multiple_of(pl.program_id(1) * time_tile, time_tile)
        xs = x_ref[pl.ds(t0, time_tile), :].astype(jnp.float32)
    res_ref[...] = (xs - mean).astype(res_ref.dtype)


# ---------------------------------------------------------------------------
# Wrappers
# ---------------------------------------------------------------------------
def _call(x, kernel_size, stride, with_residual, time_tile):
    batch, seq_len, channels = x.shape
    w_np, out_len = _band_matrix(seq_len, kernel_size, stride)
    if with_residual and out_len != seq_len:
        raise ValueError("series_decomp needs stride=1 and an odd kernel_size")

    if time_tile is None:
        time_tile = _pick_time_tile(out_len, channels, batch)
    if out_len % time_tile != 0 or (time_tile % 8 != 0 and time_tile != out_len):
        raise ValueError(f"bad time_tile={time_tile} for out_len={out_len}")
    n_time = out_len // time_tile
    grid = (batch, n_time)            # time innermost -> x stays VMEM-resident

    w = jnp.asarray(w_np)
    elt = jnp.dtype(x.dtype).itemsize

    in_specs = [
        pl.BlockSpec((time_tile, seq_len), lambda b, t: (t, 0)),           # W
        pl.BlockSpec((None, seq_len, channels), lambda b, t: (b, 0, 0)),   # x
    ]
    out_block = pl.BlockSpec((None, time_tile, channels), lambda b, t: (b, t, 0))

    # VMEM footprint: double-buffered blocks + f32 temporaries.
    n_out = 2 if with_residual else 1
    est = (2 * time_tile * seq_len * 4                    # W blocks
           + 2 * seq_len * channels * elt                 # x blocks
           + n_out * 2 * time_tile * channels * elt       # output blocks
           + (seq_len * channels + (1 + n_out) * time_tile * channels) * 4)
    vmem_limit = int(min(max(2 * est, 32 * 1024 * 1024), 48 * 1024 * 1024))
    cparams = pltpu.CompilerParams(
        dimension_semantics=("parallel", "parallel"),
        vmem_limit_bytes=vmem_limit)

    if with_residual:
        kernel = functools.partial(_series_decomp_kernel,
                                   time_tile=time_tile, seq_len=seq_len)
        mean, res = pl.pallas_call(
            kernel,
            out_shape=(jax.ShapeDtypeStruct((batch, out_len, channels), x.dtype),
                       jax.ShapeDtypeStruct((batch, seq_len, channels), x.dtype)),
            grid=grid,
            in_specs=in_specs,
            out_specs=(out_block, out_block),
            compiler_params=cparams,
        )(w, x)
        return mean, res

    mean = pl.pallas_call(
        _moving_avg_kernel,
        out_shape=jax.ShapeDtypeStruct((batch, out_len, channels), x.dtype),
        grid=grid,
        in_specs=in_specs,
        out_specs=out_block,
        compiler_params=cparams,
    )(w, x)
    return mean


@functools.partial(jax.jit, static_argnames=("kernel_size", "stride", "time_tile"))
def moving_avg(x, kernel_size, stride=1, *, time_tile=None):
    """Pallas TPU equivalent of Autoformer's moving_avg.forward for x:(B, L, C)."""
    return _call(x, kernel_size, stride, with_residual=False, time_tile=time_tile)


@functools.partial(jax.jit, static_argnames=("kernel_size", "time_tile"))
def series_decomp(x, kernel_size, *, time_tile=None):
    """Fused trend/seasonal decomposition: returns (seasonal, trend)."""
    mean, res = _call(x, kernel_size, 1, with_residual=True, time_tile=time_tile)
    return res, mean


# ---------------------------------------------------------------------------
# Pure-JAX reference (replicate pad along time + AvgPool1d) and test.
# ---------------------------------------------------------------------------
def _reference_moving_avg(x, kernel_size, stride=1):
    pad = (kernel_size - 1) // 2
    front = jnp.repeat(x[:, :1, :], pad, axis=1)
    end = jnp.repeat(x[:, -1:, :], pad, axis=1)
    xp = jnp.concatenate([front, x, end], axis=1)
    out_len = (xp.shape[1] - kernel_size) // stride + 1
    return jnp.stack(
        [jnp.mean(xp[:, t * stride:t * stride + kernel_size, :], axis=1)
         for t in range(out_len)], axis=1)


if __name__ == "__main__":
    # Small deterministic shapes consistent with the module's forward:
    # (batch, seq_len, enc_in) -- enc_in=7 mirrors Autoformer's raw-series case.
    B, L, C = 2, 16, 7
    x = jax.random.normal(jax.random.PRNGKey(0), (B, L, C), dtype=jnp.float32)

    tol = 1e-3   # MXU f32 matmul at HIGHEST precision; leaves ample headroom.
    ok = True

    for kernel_size, stride in ((25, 1), (5, 1), (6, 1), (5, 2)):
        out = jax.block_until_ready(moving_avg(x, kernel_size=kernel_size,
                                               stride=stride))
        ref = _reference_moving_avg(x, kernel_size, stride)
        ok &= out.shape == ref.shape
        ok &= bool(jnp.allclose(out, ref, atol=tol, rtol=tol))

    # Fused series_decomp (the Autoformer usage pattern: seasonal + trend).
    seasonal, trend = series_decomp(x, kernel_size=25)
    jax.block_until_ready((seasonal, trend))
    ref_trend = _reference_moving_avg(x, 25, 1)
    ok &= bool(jnp.allclose(trend, ref_trend, atol=tol, rtol=tol))
    ok &= bool(jnp.allclose(seasonal, x - ref_trend, atol=tol, rtol=tol))

    # Forced time tiling exercises the tiled-W / resident-x / dynamic-slice
    # residual path (grid = (B, 2)).
    out = jax.block_until_ready(moving_avg(x, kernel_size=25, time_tile=8))
    ok &= bool(jnp.allclose(out, ref_trend, atol=tol, rtol=tol))
    seasonal2, trend2 = series_decomp(x, kernel_size=25, time_tile=8)
    jax.block_until_ready((seasonal2, trend2))
    ok &= bool(jnp.allclose(trend2, ref_trend, atol=tol, rtol=tol))
    ok &= bool(jnp.allclose(seasonal2, x - ref_trend, atol=tol, rtol=tol))

    assert ok
    print("KERNEL_OK")
</pallas_src>

<mosaic_0001>
module attributes {stable_mosaic.version = 11 : i64} {
  func.func @_moving_avg_kernel(%arg0: i32, %arg1: i32, %arg2: memref<16x16xf32, #tpu.memory_space<vmem>>, %arg3: memref<1x16x7xf32, #tpu.memory_space<vmem>>, %arg4: memref<1x16x7xf32, #tpu.memory_space<vmem>>) attributes {dimension_semantics = [#tpu.dimension_semantics<parallel>, #tpu.dimension_semantics<parallel>], iteration_bounds = array<i64: 2, 1>, scalar_prefetch = 0 : i64, scratch_operands = 0 : i64, tpu.core_type = #tpu.core_type<tc>, window_params = [{transform_indices = @transform_0, window_bounds = array<i64: 16, 16>}, {transform_indices = @transform_1, window_bounds = array<i64: 1, 16, 7>}, {transform_indices = @transform_2, window_bounds = array<i64: 1, 16, 7>}]} {
    %c0 = arith.constant 0 : index
    %c0_0 = arith.constant 0 : index
    %c0_1 = arith.constant 0 : index
    %0 = vector.load %arg3[%c0, %c0_0, %c0_1] : memref<1x16x7xf32, #tpu.memory_space<vmem>>, vector<1x16x7xf32>
    %1 = vector.shape_cast %0 : vector<1x16x7xf32> to vector<16x7xf32>
    %c0_2 = arith.constant 0 : index
    %c0_3 = arith.constant 0 : index
    %2 = vector.load %arg2[%c0_2, %c0_3] : memref<16x16xf32, #tpu.memory_space<vmem>>, vector<16x16xf32>
    %cst = arith.constant dense<0.000000e+00> : vector<16x7xf32>
    %3 = tpu.matmul %2, %1, %cst {dimension_numbers = #tpu.dot_dimension_numbers<[1], [0], [0], [1], [0, 0, 1, 1], [], []>, precision = #tpu.contract_precision<fp32>} : vector<16x16xf32>, vector<16x7xf32>, vector<16x7xf32> -> vector<16x7xf32>
    %c0_4 = arith.constant 0 : index
    %c0_5 = arith.constant 0 : index
    %c0_6 = arith.constant 0 : index
    %4 = vector.load %arg4[%c0_4, %c0_5, %c0_6] : memref<1x16x7xf32, #tpu.memory_space<vmem>>, vector<1x16x7xf32>
    %5 = vector.shape_cast %4 : vector<1x16x7xf32> to vector<16x7xf32>
    %6 = vector.shape_cast %3 : vector<16x7xf32> to vector<1x16x7xf32>
    tpu.vector_store %arg4[%c0_4, %c0_5, %c0_6], %6 {strides = array<i32>} : memref<1x16x7xf32, #tpu.memory_space<vmem>>, vector<1x16x7xf32>,
    return
  }
  func.func @transform_0(%arg0: i32, %arg1: i32) -> (i32, i32) {
    %c0_i32 = arith.constant 0 : i32
    %c0_i32_0 = arith.constant 0 : i32
    return %arg1, %c0_i32 : i32, i32
  }
  func.func @transform_1(%arg0: i32, %arg1: i32) -> (i32, i32, i32) {
    %c0_i32 = arith.constant 0 : i32
    %c0_i32_0 = arith.constant 0 : i32
    %c0_i32_1 = arith.constant 0 : i32
    return %arg0, %c0_i32, %c0_i32_0 : i32, i32, i32
  }
  func.func @transform_2(%arg0: i32, %arg1: i32) -> (i32, i32, i32) {
    %c0_i32 = arith.constant 0 : i32
    %c0_i32_0 = arith.constant 0 : i32
    return %arg0, %arg1, %c0_i32 : i32, i32, i32
  }
}

</mosaic_0001>

<llo_original>
// kernel: moving_avg.1
$region0: #{moving_avg.1}
  #allocation0 [shape = 'u32[]', space=smem, size = 0x4, offset = 0x4, fixed_abs, tag = 'smem constant byte address 0x4 - core index']
  #allocation1 [shape = 'u32[144,128]{1,0:T(1,128)}', space=vmem, size = 0x12000, scoped, tag = 'internal scratch']
  %s0 = inlined_call_operand.vmem [shape: f32[16,16], index: 0, kind: input, shape index: {}]
  %s1 = inlined_call_operand.vmem [shape: f32[2,16,7], index: 1, kind: input, shape index: {}]
  %s2 = inlined_call_operand.vmem [shape: f32[2,16,7], index: 2, kind: output, shape index: {}]
  %s3 = sld [smem:[#allocation0]]
  $region41: #{moving_avg.1} parent=0
    _
  %s5 = ssub.s32 1, %s3
  %s6 = scalar_select 0, %s5, %s3
  loop: start=0, step=1, limit=4
  $region2: #{moving_avg.1} parent=0 // loop_pre_header
    _
  $region3: #{moving_avg.1} parent=0 // loop_header
    %s8 = sphi 0, %s12
    %p9 = scmp.ge.s32.totalorder %s8, 4
    %s15 = sphi 0, %s27
    %s16 = sphi 0, %s23
    %s17 = sphi 0, %s15
    %s18 = sphi 0, %s16
    %s19 = sphi 0, %s17
    %s20 = sphi 0, %s18
    %s30 = sphi 0, %s32
    %s33 = sphi 0, %s30
    %s34 = sphi 0, %s33
    %s50 = sphi 0, %s34
    %s56 = sphi 0, %s58
    %s59 = sphi 0, %s56
    %s60 = sphi 0, %s59
    %s76 = sphi 0, %s60
    %s84 = sphi 0, %s86
    %s87 = sphi 0, %s84
    %s88 = sphi 0, %s87
    %s104 = sphi 0, %s88
  $region4: #{moving_avg.1} parent=0 // loop_header_branch
    %11 = sbr.rel (%p9) target = $region8
  $region5: #{moving_avg.1} parent=0 // loop_body
    %s13 = ssub.s32 %s8, 1
    %s14 = ssub.s32 %s8, 2
    %s21 = sadd.s32 1, %s16
    %p22 = scmp.ge.s32.totalorder %s21, 1
    %s23 = scalar_select %p22, 0, %s21
    %s24 = sadd.s32 1, %s15
    %s25 = scalar_select %p22, %s24, %s15
    %p26 = scmp.ge.s32.totalorder %s25, 2
    %s27 = scalar_select %p26, 0, %s25
    %s28 = ssub.s32 %s16, %s23
    %p29 = scmp.eq.s32.totalorder %s28, 0
    %s31 = sadd.s32 %s30, 1
    %s32 = scalar_select %p29, %s30, %s31
    %p35 = pneg %p29
    %p36 = scmp.eq.s32.totalorder %s8, 1
    %p37 = por %p35, %p36
    %p38 = scmp.ne.s32.totalorder %s30, %s33
    %p39 = scmp.eq.s32.totalorder %s8, 0
    %p40 = por %p38, %p39
    %p41 = scmp.ne.s32.totalorder %s30, %s33
    %p42 = scmp.eq.s32.totalorder %s13, 1
    %p43 = por %p41, %p42
    %p44 = scmp.ne.s32.totalorder %s33, %s34
    %p45 = scmp.eq.s32.totalorder %s13, 0
    %p46 = por %p44, %p45
    %p47 = scmp.ne.s32.totalorder %s33, %s34
    %p48 = scmp.eq.s32.totalorder %s14, 1
    %p49 = por %p47, %p48
    %p51 = scmp.ne.s32.totalorder %s34, %s50
    %p52 = scmp.eq.s32.totalorder %s14, 0
    %p53 = por %p51, %p52
    %s54 = ssub.s32 %s15, %s27
    %p55 = scmp.eq.s32.totalorder %s54, 0
    %s57 = sadd.s32 %s56, 1
    %s58 = scalar_select %p55, %s56, %s57
    %p61 = pneg %p55
    %p62 = scmp.eq.s32.totalorder %s8, 1
    %p63 = por %p61, %p62
    %p64 = scmp.ne.s32.totalorder %s56, %s59
    %p65 = scmp.eq.s32.totalorder %s8, 0
    %p66 = por %p64, %p65
    %p67 = scmp.ne.s32.totalorder %s56, %s59
    %p68 = scmp.eq.s32.totalorder %s13, 1
    %p69 = por %p67, %p68
    %p70 = scmp.ne.s32.totalorder %s59, %s60
    %p71 = scmp.eq.s32.totalorder %s13, 0
    %p72 = por %p70, %p71
    %p73 = scmp.ne.s32.totalorder %s59, %s60
    %p74 = scmp.eq.s32.totalorder %s14, 1
    %p75 = por %p73, %p74
    %p77 = scmp.ne.s32.totalorder %s60, %s76
    %p78 = scmp.eq.s32.totalorder %s14, 0
    %p79 = por %p77, %p78
    %s80 = ssub.s32 %s15, %s27
    %s81 = ssub.s32 %s16, %s23
    %s82 = sor.u32 %s80, %s81
    %p83 = scmp.eq.s32.totalorder %s82, 0
    %s85 = sadd.s32 %s84, 1
    %s86 = scalar_select %p83, %s84, %s85
    %p89 = pneg %p83
    %p90 = scmp.eq.s32.totalorder %s8, 1
    %p91 = por %p89, %p90
    %p92 = scmp.ne.s32.totalorder %s84, %s87
    %p93 = scmp.eq.s32.totalorder %s8, 0
    %p94 = por %p92, %p93
    %p95 = scmp.ne.s32.totalorder %s84, %s87
    %p96 = scmp.eq.s32.totalorder %s13, 1
    %p97 = por %p95, %p96
    %p98 = scmp.ne.s32.totalorder %s87, %s88
    %p99 = scmp.eq.s32.totalorder %s13, 0
    %p100 = por %p98, %p99
    %p101 = scmp.ne.s32.totalorder %s87, %s88
    %p102 = scmp.eq.s32.totalorder %s14, 1
    %p103 = por %p101, %p102
    %p105 = scmp.ne.s32.totalorder %s88, %s104
    %p106 = scmp.eq.s32.totalorder %s14, 0
    %p107 = por %p105, %p106
    %p108 = scmp.le.s32.totalorder 1, %s8
    %p109 = scmp.lt.s32.totalorder %s8, 3
    %p110 = pnand %p108, %p109
    %p111 = pneg %p110
    // Predicated region
    $region9: #{moving_avg.1} parent=5 // pred_check
      _
    $region10: #{moving_avg.1} parent=5 // pred_check_branch
      %113 = sbr.rel (%p110) target = $region12
    $region11: #{moving_avg.1} parent=5 // pred_region
      %s114 = ssub.s32 %s8, 1
      // Predicated region
      $region13: #{moving_avg.1} parent=11 // pred_check
        %p115 = pneg %p46
      $region14: #{moving_avg.1} parent=11 // pred_check_branch
        %117 = sbr.rel (%p115) target = $region16
      $region15: #{moving_avg.1} parent=11 // pred_region
        %s118 = smul.u32 2, %s18
        %p119 = scmp.lt.s32.totalorder %s118, 1
        %s120 = scalar_select %p119, %s118, 1
        %s121 = smul.addr %s120, 8
        %s122 = scalar_lea.vmem %s0, %s121
        %s123 = smul.u32 2, %s18
      $region16: #{moving_avg.1} parent=11 // pred_fallthru
        _
    $region12: #{moving_avg.1} parent=5 // pred_fallthru
      _
    %p124 = scmp.lt.s32.totalorder %s8, 2
    // Predicated region
    $region17: #{moving_avg.1} parent=5 // pred_check
      %p125 = pneg %p124
    $region18: #{moving_avg.1} parent=5 // pred_check_branch
      %127 = sbr.rel (%p125) target = $region20
    $region19: #{moving_avg.1} parent=5 // pred_region
      // Predicated region
      $region21: #{moving_avg.1} parent=19 // pred_check
        %p128 = pneg %p66
      $region22: #{moving_avg.1} parent=19 // pred_check_branch
        %130 = sbr.rel (%p128) target = $region24
      $region23: #{moving_avg.1} parent=19 // pred_region
        %p131 = scmp.lt.s32.totalorder %s15, 1
        %s132 = scalar_select %p131, %s15, 1
        %s133 = smul.addr %s132, 2
        %s134 = smul.addr %s133, 8
        %s135 = scalar_lea.vmem %s1, %s134
      $region24: #{moving_avg.1} parent=19 // pred_fallthru
        _
    $region20: #{moving_avg.1} parent=5 // pred_fallthru
      _
    %p136 = scmp.le.s32.totalorder 1, %s8
    %p137 = scmp.lt.s32.totalorder %s8, 3
    %p138 = pnand %p136, %p137
    %p139 = pneg %p138
    // Predicated region
    $region25: #{moving_avg.1} parent=5 // pred_check
      _
    $region26: #{moving_avg.1} parent=5 // pred_check_branch
      %141 = sbr.rel (%p138) target = $region28
    $region27: #{moving_avg.1} parent=5 // pred_region
      %s142 = ssub.s32 %s8, 1
      %s143 = smul.u32 2, %s18
      %p144 = scmp.lt.s32.totalorder %s143, 1
      %s145 = scalar_select %p144, %s143, 1
      %s146 = smul.addr %s145, 8
      %s147 = scalar_lea.vmem %s0, %s146
      %p148 = pneg %p46
      %p149 = pneg %p43
      %p150 = scmp.lt.s32.totalorder %s17, 1
      %s151 = scalar_select %p150, %s17, 1
      %s152 = smul.addr %s151, 2
      %s153 = smul.addr %s152, 8
      %s154 = scalar_lea.vmem %s1, %s153
      %p155 = pneg %p72
      %p156 = pneg %p69
      %p157 = pneg %p100
      %p158 = pneg %p97
      %s159 = smul.u32 2, %s18
      %p160 = scmp.lt.s32.totalorder %s17, 1
      %s161 = scalar_select %p160, %s17, 1
      %p162 = scmp.lt.s32.totalorder %s159, 1
      %s163 = scalar_select %p162, %s159, 1
      %s164 = smul.addr %s161, 2
      %s165 = sadd.s32 %s163, %s164
      %s166 = smul.addr %s165, 8
      %s167 = scalar_lea.vmem %s2, %s166
      %s168 = smul.u32 2, %s18
      %p169 = scmp.lt.s32.totalorder %s168, 1
      %s170 = scalar_select %p169, %s168, 1
      %s171 = smul.addr %s170, 8
      %s172 = scalar_lea.vmem %s0, %s171
      %s173 = smul.u32 2, %s18
      %p174 = scmp.lt.s32.totalorder %s17, 1
      %s175 = scalar_select %p174, %s17, 1
      %s176 = smul.addr %s175, 2
      %s177 = smul.addr %s176, 8
      %s178 = scalar_lea.vmem %s1, %s177
      %s179 = smul.u32 2, %s18
      %p180 = scmp.lt.s32.totalorder %s17, 1
      %s181 = scalar_select %p180, %s17, 1
      %p182 = scmp.lt.s32.totalorder %s179, 1
      %s183 = scalar_select %p182, %s179, 1
      %s184 = smul.addr %s181, 2
      %s185 = sadd.s32 %s183, %s184
      %s186 = smul.addr %s185, 8
      %s187 = scalar_lea.vmem %s2, %s186
      %s188 = smul.u32 2, %s18
      %v189 = vld [vmem:[%s178] sm:$0xff]
      %v190 = vld [vmem:[%s178 + $0x8] sm:$0xff]
      %v191 = vld [vmem:[%s172] sm:$0xff]
      %v192 = vld [vmem:[%s172 + $0x8] sm:$0xff]
      %vm193 = vcmask 130048
      %v195 = vsel %vm193, %v191, 0
      %v198 = vsel %vm193, %v192, 0
      %200 = vmatprep.subr.mxu0 0.0
      %201 = vmatpush1.msra.mxu0 0.0
      %202 = vmatprep.subr.mxu0 0.0
      %203 = vmatpush1.msra.mxu0 0.0
      %204 = vmatprep.subr.mxu0 0.0
      %205 = vmatpush1.msra.mxu0 0.0
      %206 = vmatprep.subr.mxu0 0.0
      %207 = vmatpush1.msra.mxu0 0.0
      %208 = vmatprep.subr.mxu0 0.0
      %209 = vmatpush1.msra.mxu0 0.0
      %210 = vmatprep.subr.mxu0 0.0
      %211 = vmatpush1.msra.mxu0 0.0
      %212 = vmatprep.subr.mxu0 0.0
      %213 = vmatpush1.msra.mxu0 0.0
      %214 = vmatprep.subr.mxu0 0.0
      %215 = vmatpush1.msra.mxu0 0.0
      %216 = vmatprep.subr.mxu0 0.0
      %217 = vmatpush1.msra.mxu0 0.0
      %218 = vmatprep.subr.mxu0 0.0
      %219 = vmatpush1.msra.mxu0 0.0
      %220 = vmatprep.subr.mxu0 0.0
      %221 = vmatpush1.msra.mxu0 0.0
      %222 = vmatprep.subr.mxu0 0.0
      %223 = vmatpush1.msra.mxu0 0.0
      %224 = vmatprep.subr.mxu0 0.0
      %225 = vmatpush1.msra.mxu0 0.0
      %226 = vmatprep.subr.mxu0 0.0
      %227 = vmatpush1.msra.mxu0 0.0
      %228 = vmatprep.subr.mxu0 0.0
      %v229 = vand.u32 %v190, 4294901760
      %230 = vmatpush1.msra.mxu0 %v229
      %231 = vmatprep.subr.mxu0 0.0
      %v232 = vand.u32 %v189, 4294901760
      %233 = vmatpush1.msra.mxu0 %v232
      %234 = vmatprep.subr.mxu0 0.0
      %235 = vmatpush2.msra.mxu0 0.0
      %236 = vmatprep.subr.mxu0 0.0
      %237 = vmatpush2.msra.mxu0 0.0
      %238 = vmatprep.subr.mxu0 0.0
      %239 = vmatpush2.msra.mxu0 0.0
      %240 = vmatprep.subr.mxu0 0.0
      %241 = vmatpush2.msra.mxu0 0.0
      %242 = vmatprep.subr.mxu0 0.0
      %243 = vmatpush2.msra.mxu0 0.0
      %244 = vmatprep.subr.mxu0 0.0
      %245 = vmatpush2.msra.mxu0 0.0
      %246 = vmatprep.subr.mxu0 0.0
      %247 = vmatpush2.msra.mxu0 0.0
      %248 = vmatprep.subr.mxu0 0.0
      %249 = vmatpush2.msra.mxu0 0.0
      %250 = vmatprep.subr.mxu0 0.0
      %251 = vmatpush2.msra.mxu0 0.0
      %252 = vmatprep.subr.mxu0 0.0
      %253 = vmatpush2.msra.mxu0 0.0
      %254 = vmatprep.subr.mxu0 0.0
      %255 = vmatpush2.msra.mxu0 0.0
      %256 = vmatprep.subr.mxu0 0.0
      %257 = vmatpush2.msra.mxu0 0.0
      %258 = vmatprep.subr.mxu0 0.0
      %259 = vmatpush2.msra.mxu0 0.0
      %260 = vmatprep.subr.mxu0 0.0
      %261 = vmatpush2.msra.mxu0 0.0
      %262 = vmatprep.subr.mxu0 0.0
      %263 = vmatpush2.msra.mxu0 0.0
      %264 = vmatprep.subr.mxu0 0.0
      %265 = vmatpush2.msra.mxu0 0.0
      %266 = vmatprep.mubr.f32.mxu0 0.0
      %v267 = vand.u32 %v195, 4294901760
      %v268 = vsub.f32 %v195, %v267
      %v269 = vand.u32 %v268, 4294901760
      %v270 = vsub.f32 %v268, %v269
      %v271 = vand.u32 %v270, 4294901760
      %272 = vmatmul.mubr.f32.gmra.mxu0 %v271
      %v273 = vpop.f32.mrf.mxu0
      %v274 = vadd.f32 0.0, %v273
      %v275 = vpop.f32.mrf.mxu0
      %276 = vmatprep.mubr.f32.mxu0 0.0
      %v277 = vand.u32 %v198, 4294901760
      %v278 = vsub.f32 %v198, %v277
      %v279 = vand.u32 %v278, 4294901760
      %v280 = vsub.f32 %v278, %v279
      %v281 = vand.u32 %v280, 4294901760
      %282 = vmatmul.mubr.f32.gmra.mxu0 %v281
      %v283 = vpop.f32.mrf.mxu0
      %v284 = vadd.f32 0.0, %v283
      %v285 = vpop.f32.mrf.mxu0
      %286 = vdwg.mxu0
      %287 = vmatprep.subr.mxu0 0.0
      %288 = vmatpush1.msra.mxu0 0.0
      %289 = vmatprep.subr.mxu0 0.0
      %290 = vmatpush1.msra.mxu0 0.0
      %291 = vmatprep.subr.mxu0 0.0
      %292 = vmatpush1.msra.mxu0 0.0
      %293 = vmatprep.subr.mxu0 0.0
      %294 = vmatpush1.msra.mxu0 0.0
      %295 = vmatprep.subr.mxu0 0.0
      %296 = vmatpush1.msra.mxu0 0.0
      %297 = vmatprep.subr.mxu0 0.0
      %298 = vmatpush1.msra.mxu0 0.0
      %299 = vmatprep.subr.mxu0 0.0
      %300 = vmatpush1.msra.mxu0 0.0
      %301 = vmatprep.subr.mxu0 0.0
      %302 = vmatpush1.msra.mxu0 0.0
      %303 = vmatprep.subr.mxu0 0.0
      %304 = vmatpush1.msra.mxu0 0.0
      %305 = vmatprep.subr.mxu0 0.0
      %306 = vmatpush1.msra.mxu0 0.0
      %307 = vmatprep.subr.mxu0 0.0
      %308 = vmatpush1.msra.mxu0 0.0
      %309 = vmatprep.subr.mxu0 0.0
      %310 = vmatpush1.msra.mxu0 0.0
      %311 = vmatprep.subr.mxu0 0.0
      %312 = vmatpush1.msra.mxu0 0.0
      %313 = vmatprep.subr.mxu0 0.0
      %314 = vmatpush1.msra.mxu0 0.0
      %315 = vmatprep.subr.mxu0 0.0
      %v316 = vand.u32 %v190, 4294901760
      %v317 = vsub.f32 %v190, %v316
      %v318 = vand.u32 %v317, 4294901760
      %v319 = vsub.f32 %v317, %v318
      %v320 = vand.u32 %v319, 4294901760
      %321 = vmatpush1.msra.mxu0 %v320
      %322 = vmatprep.subr.mxu0 0.0
      %v323 = vand.u32 %v189, 4294901760
      %v324 = vsub.f32 %v189, %v323
      %v325 = vand.u32 %v324, 4294901760
      %v326 = vsub.f32 %v324, %v325
      %v327 = vand.u32 %v326, 4294901760
      %328 = vmatpush1.msra.mxu0 %v327
      %329 = vmatprep.subr.mxu0 0.0
      %330 = vmatpush2.msra.mxu0 0.0
      %331 = vmatprep.subr.mxu0 0.0
      %332 = vmatpush2.msra.mxu0 0.0
      %333 = vmatprep.subr.mxu0 0.0
      %334 = vmatpush2.msra.mxu0 0.0
      %335 = vmatprep.subr.mxu0 0.0
      %336 = vmatpush2.msra.mxu0 0.0
      %337 = vmatprep.subr.mxu0 0.0
      %338 = vmatpush2.msra.mxu0 0.0
      %339 = vmatprep.subr.mxu0 0.0
      %340 = vmatpush2.msra.mxu0 0.0
      %341 = vmatprep.subr.mxu0 0.0
      %342 = vmatpush2.msra.mxu0 0.0
      %343 = vmatprep.subr.mxu0 0.0
      %344 = vmatpush2.msra.mxu0 0.0
      %345 = vmatprep.subr.mxu0 0.0
      %346 = vmatpush2.msra.mxu0 0.0
      %347 = vmatprep.subr.mxu0 0.0
      %348 = vmatpush2.msra.mxu0 0.0
      %349 = vmatprep.subr.mxu0 0.0
      %350 = vmatpush2.msra.mxu0 0.0
      %351 = vmatprep.subr.mxu0 0.0
      %352 = vmatpush2.msra.mxu0 0.0
      %353 = vmatprep.subr.mxu0 0.0
      %354 = vmatpush2.msra.mxu0 0.0
      %355 = vmatprep.subr.mxu0 0.0
      %356 = vmatpush2.msra.mxu0 0.0
      %357 = vmatprep.subr.mxu0 0.0
      %358 = vmatpush2.msra.mxu0 0.0
      %359 = vmatprep.subr.mxu0 0.0
      %360 = vmatpush2.msra.mxu0 0.0
      %361 = vmatprep.mubr.f32.mxu0 0.0
      %v362 = vand.u32 %v195, 4294901760
      %363 = vmatmul.mubr.f32.gmra.mxu0 %v362
      %v364 = vpop.f32.mrf.mxu0
      %v365 = vadd.f32 %v274, %v364
      %v366 = vpop.f32.mrf.mxu0
      %367 = vmatprep.mubr.f32.mxu0 0.0
      %v368 = vand.u32 %v198, 4294901760
      %369 = vmatmul.mubr.f32.gmra.mxu0 %v368
      %v370 = vpop.f32.mrf.mxu0
      %v371 = vadd.f32 %v284, %v370
      %v372 = vpop.f32.mrf.mxu0
      %373 = vdwg.mxu0
      %374 = vmatprep.subr.mxu0 0.0
      %375 = vmatpush1.msra.mxu0 0.0
      %376 = vmatprep.subr.mxu0 0.0
      %377 = vmatpush1.msra.mxu0 0.0
      %378 = vmatprep.subr.mxu0 0.0
      %379 = vmatpush1.msra.mxu0 0.0
      %380 = vmatprep.subr.mxu0 0.0
      %381 = vmatpush1.msra.mxu0 0.0
      %382 = vmatprep.subr.mxu0 0.0
      %383 = vmatpush1.msra.mxu0 0.0
      %384 = vmatprep.subr.mxu0 0.0
      %385 = vmatpush1.msra.mxu0 0.0
      %386 = vmatprep.subr.mxu0 0.0
      %387 = vmatpush1.msra.mxu0 0.0
      %388 = vmatprep.subr.mxu0 0.0
      %389 = vmatpush1.msra.mxu0 0.0
      %390 = vmatprep.subr.mxu0 0.0
      %391 = vmatpush1.msra.mxu0 0.0
      %392 = vmatprep.subr.mxu0 0.0
      %393 = vmatpush1.msra.mxu0 0.0
      %394 = vmatprep.subr.mxu0 0.0
      %395 = vmatpush1.msra.mxu0 0.0
      %396 = vmatprep.subr.mxu0 0.0
      %397 = vmatpush1.msra.mxu0 0.0
      %398 = vmatprep.subr.mxu0 0.0
      %399 = vmatpush1.msra.mxu0 0.0
      %400 = vmatprep.subr.mxu0 0.0
      %401 = vmatpush1.msra.mxu0 0.0
      %402 = vmatprep.subr.mxu0 0.0
      %v403 = vand.u32 %v190, 4294901760
      %v404 = vsub.f32 %v190, %v403
      %405 = vmatpush1.msra.mxu0 %v404
      %406 = vmatprep.subr.mxu0 0.0
      %v407 = vand.u32 %v189, 4294901760
      %v408 = vsub.f32 %v189, %v407
      %409 = vmatpush1.msra.mxu0 %v408
      %410 = vmatprep.subr.mxu0 0.0
      %411 = vmatpush2.msra.mxu0 0.0
      %412 = vmatprep.subr.mxu0 0.0
      %413 = vmatpush2.msra.mxu0 0.0
      %414 = vmatprep.subr.mxu0 0.0
      %415 = vmatpush2.msra.mxu0 0.0
      %416 = vmatprep.subr.mxu0 0.0
      %417 = vmatpush2.msra.mxu0 0.0
      %418 = vmatprep.subr.mxu0 0.0
      %419 = vmatpush2.msra.mxu0 0.0
      %420 = vmatprep.subr.mxu0 0.0
      %421 = vmatpush2.msra.mxu0 0.0
      %422 = vmatprep.subr.mxu0 0.0
      %423 = vmatpush2.msra.mxu0 0.0
      %424 = vmatprep.subr.mxu0 0.0
      %425 = vmatpush2.msra.mxu0 0.0
      %426 = vmatprep.subr.mxu0 0.0
      %427 = vmatpush2.msra.mxu0 0.0
      %428 = vmatprep.subr.mxu0 0.0
      %429 = vmatpush2.msra.mxu0 0.0
      %430 = vmatprep.subr.mxu0 0.0
      %431 = vmatpush2.msra.mxu0 0.0
      %432 = vmatprep.subr.mxu0 0.0
      %433 = vmatpush2.msra.mxu0 0.0
      %434 = vmatprep.subr.mxu0 0.0
      %435 = vmatpush2.msra.mxu0 0.0
      %436 = vmatprep.subr.mxu0 0.0
      %437 = vmatpush2.msra.mxu0 0.0
      %438 = vmatprep.subr.mxu0 0.0
      %439 = vmatpush2.msra.mxu0 0.0
      %440 = vmatprep.subr.mxu0 0.0
      %441 = vmatpush2.msra.mxu0 0.0
      %442 = vmatprep.mubr.f32.mxu0 0.0
      %v443 = vand.u32 %v195, 4294901760
      %v444 = vsub.f32 %v195, %v443
      %445 = vmatmul.mubr.f32.gmra.mxu0 %v444
      %v446 = vpop.f32.mrf.mxu0
      %v447 = vadd.f32 %v365, %v446
      %v448 = vpop.f32.mrf.mxu0
      %449 = vmatprep.mubr.f32.mxu0 0.0
      %v450 = vand.u32 %v198, 4294901760
      %v451 = vsub.f32 %v198, %v450
      %452 = vmatmul.mubr.f32.gmra.mxu0 %v451
      %v453 = vpop.f32.mrf.mxu0
      %v454 = vadd.f32 %v371, %v453
      %v455 = vpop.f32.mrf.mxu0
      %456 = vdwg.mxu0
      %457 = vmatprep.subr.mxu0 0.0
      %458 = vmatpush1.msra.mxu0 0.0
      %459 = vmatprep.subr.mxu0 0.0
      %460 = vmatpush1.msra.mxu0 0.0
      %461 = vmatprep.subr.mxu0 0.0
      %462 = vmatpush1.msra.mxu0 0.0
      %463 = vmatprep.subr.mxu0 0.0
      %464 = vmatpush1.msra.mxu0 0.0
      %465 = vmatprep.subr.mxu0 0.0
      %466 = vmatpush1.msra.mxu0 0.0
      %467 = vmatprep.subr.mxu0 0.0
      %468 = vmatpush1.msra.mxu0 0.0
      %469 = vmatprep.subr.mxu0 0.0
      %470 = vmatpush1.msra.mxu0 0.0
      %471 = vmatprep.subr.mxu0 0.0
      %472 = vmatpush1.msra.mxu0 0.0
      %473 = vmatprep.subr.mxu0 0.0
      %474 = vmatpush1.msra.mxu0 0.0
      %475 = vmatprep.subr.mxu0 0.0
      %476 = vmatpush1.msra.mxu0 0.0
      %477 = vmatprep.subr.mxu0 0.0
      %478 = vmatpush1.msra.mxu0 0.0
      %479 = vmatprep.subr.mxu0 0.0
      %480 = vmatpush1.msra.mxu0 0.0
      %481 = vmatprep.subr.mxu0 0.0
      %482 = vmatpush1.msra.mxu0 0.0
      %483 = vmatprep.subr.mxu0 0.0
      %484 = vmatpush1.msra.mxu0 0.0
      %485 = vmatprep.subr.mxu0 0.0
      %v486 = vand.u32 %v190, 4294901760
      %487 = vmatpush1.msra.mxu0 %v486
      %488 = vmatprep.subr.mxu0 0.0
      %v489 = vand.u32 %v189, 4294901760
      %490 = vmatpush1.msra.mxu0 %v489
      %491 = vmatprep.subr.mxu0 0.0
      %492 = vmatpush2.msra.mxu0 0.0
      %493 = vmatprep.subr.mxu0 0.0
      %494 = vmatpush2.msra.mxu0 0.0
      %495 = vmatprep.subr.mxu0 0.0
      %496 = vmatpush2.msra.mxu0 0.0
      %497 = vmatprep.subr.mxu0 0.0
      %498 = vmatpush2.msra.mxu0 0.0
      %499 = vmatprep.subr.mxu0 0.0
      %500 = vmatpush2.msra.mxu0 0.0
      %501 = vmatprep.subr.mxu0 0.0
      %502 = vmatpush2.msra.mxu0 0.0
      %503 = vmatprep.subr.mxu0 0.0
      %504 = vmatpush2.msra.mxu0 0.0
      %505 = vmatprep.subr.mxu0 0.0
      %506 = vmatpush2.msra.mxu0 0.0
      %507 = vmatprep.subr.mxu0 0.0
      %508 = vmatpush2.msra.mxu0 0.0
      %509 = vmatprep.subr.mxu0 0.0
      %510 = vmatpush2.msra.mxu0 0.0
      %511 = vmatprep.subr.mxu0 0.0
      %512 = vmatpush2.msra.mxu0 0.0
      %513 = vmatprep.subr.mxu0 0.0
      %514 = vmatpush2.msra.mxu0 0.0
      %515 = vmatprep.subr.mxu0 0.0
      %516 = vmatpush2.msra.mxu0 0.0
      %517 = vmatprep.subr.mxu0 0.0
      %518 = vmatpush2.msra.mxu0 0.0
      %519 = vmatprep.subr.mxu0 0.0
      %520 = vmatpush2.msra.mxu0 0.0
      %521 = vmatprep.subr.mxu0 0.0
      %522 = vmatpush2.msra.mxu0 0.0
      %523 = vmatprep.mubr.f32.mxu0 0.0
      %v524 = vand.u32 %v195, 4294901760
      %v525 = vsub.f32 %v195, %v524
      %v526 = vand.u32 %v525, 4294901760
      %527 = vmatmul.mubr.f32.gmra.mxu0 %v526
      %v528 = vpop.f32.mrf.mxu0
      %v529 = vadd.f32 %v447, %v528
      %v530 = vpop.f32.mrf.mxu0
      %531 = vmatprep.mubr.f32.mxu0 0.0
      %v532 = vand.u32 %v198, 4294901760
      %v533 = vsub.f32 %v198, %v532
      %v534 = vand.u32 %v533, 4294901760
      %535 = vmatmul.mubr.f32.gmra.mxu0 %v534
      %v536 = vpop.f32.mrf.mxu0
      %v537 = vadd.f32 %v454, %v536
      %v538 = vpop.f32.mrf.mxu0
      %539 = vdwg.mxu0
      %540 = vmatprep.subr.mxu0 0.0
      %541 = vmatpush1.msra.mxu0 0.0
      %542 = vmatprep.subr.mxu0 0.0
      %543 = vmatpush1.msra.mxu0 0.0
      %544 = vmatprep.subr.mxu0 0.0
      %545 = vmatpush1.msra.mxu0 0.0
      %546 = vmatprep.subr.mxu0 0.0
      %547 = vmatpush1.msra.mxu0 0.0
      %548 = vmatprep.subr.mxu0 0.0
      %549 = vmatpush1.msra.mxu0 0.0
      %550 = vmatprep.subr.mxu0 0.0
      %551 = vmatpush1.msra.mxu0 0.0
      %552 = vmatprep.subr.mxu0 0.0
      %553 = vmatpush1.msra.mxu0 0.0
      %554 = vmatprep.subr.mxu0 0.0
      %555 = vmatpush1.msra.mxu0 0.0
      %556 = vmatprep.subr.mxu0 0.0
      %557 = vmatpush1.msra.mxu0 0.0
      %558 = vmatprep.subr.mxu0 0.0
      %559 = vmatpush1.msra.mxu0 0.0
      %560 = vmatprep.subr.mxu0 0.0
      %561 = vmatpush1.msra.mxu0 0.0
      %562 = vmatprep.subr.mxu0 0.0
      %563 = vmatpush1.msra.mxu0 0.0
      %564 = vmatprep.subr.mxu0 0.0
      %565 = vmatpush1.msra.mxu0 0.0
      %566 = vmatprep.subr.mxu0 0.0
      %567 = vmatpush1.msra.mxu0 0.0
      %568 = vmatprep.subr.mxu0 0.0
      %v569 = vand.u32 %v190, 4294901760
      %v570 = vsub.f32 %v190, %v569
      %v571 = vand.u32 %v570, 4294901760
      %572 = vmatpush1.msra.mxu0 %v571
      %573 = vmatprep.subr.mxu0 0.0
      %v574 = vand.u32 %v189, 4294901760
      %v575 = vsub.f32 %v189, %v574
      %v576 = vand.u32 %v575, 4294901760
      %577 = vmatpush1.msra.mxu0 %v576
      %578 = vmatprep.subr.mxu0 0.0
      %579 = vmatpush2.msra.mxu0 0.0
      %580 = vmatprep.subr.mxu0 0.0
      %581 = vmatpush2.msra.mxu0 0.0
      %582 = vmatprep.subr.mxu0 0.0
      %583 = vmatpush2.msra.mxu0 0.0
      %584 = vmatprep.subr.mxu0 0.0
      %585 = vmatpush2.msra.mxu0 0.0
      %586 = vmatprep.subr.mxu0 0.0
      %587 = vmatpush2.msra.mxu0 0.0
      %588 = vmatprep.subr.mxu0 0.0
      %589 = vmatpush2.msra.mxu0 0.0
      %590 = vmatprep.subr.mxu0 0.0
      %591 = vmatpush2.msra.mxu0 0.0
      %592 = vmatprep.subr.mxu0 0.0
      %593 = vmatpush2.msra.mxu0 0.0
      %594 = vmatprep.subr.mxu0 0.0
      %595 = vmatpush2.msra.mxu0 0.0
      %596 = vmatprep.subr.mxu0 0.0
      %597 = vmatpush2.msra.mxu0 0.0
      %598 = vmatprep.subr.mxu0 0.0
      %599 = vmatpush2.msra.mxu0 0.0
      %600 = vmatprep.subr.mxu0 0.0
      %601 = vmatpush2.msra.mxu0 0.0
      %602 = vmatprep.subr.mxu0 0.0
      %603 = vmatpush2.msra.mxu0 0.0
      %604 = vmatprep.subr.mxu0 0.0
      %605 = vmatpush2.msra.mxu0 0.0
      %606 = vmatprep.subr.mxu0 0.0
      %607 = vmatpush2.msra.mxu0 0.0
      %608 = vmatprep.subr.mxu0 0.0
      %609 = vmatpush2.msra.mxu0 0.0
      %610 = vmatprep.mubr.f32.mxu0 0.0
      %v611 = vand.u32 %v195, 4294901760
      %612 = vmatmul.mubr.f32.gmra.mxu0 %v611
      %v613 = vpop.f32.mrf.mxu0
      %v614 = vadd.f32 %v529, %v613
      %v615 = vpop.f32.mrf.mxu0
      %616 = vmatprep.mubr.f32.mxu0 0.0
      %v617 = vand.u32 %v198, 4294901760
      %618 = vmatmul.mubr.f32.gmra.mxu0 %v617
      %v619 = vpop.f32.mrf.mxu0
      %v620 = vadd.f32 %v537, %v619
      %v621 = vpop.f32.mrf.mxu0
      %622 = vdwg.mxu0
      %623 = vmatprep.subr.mxu0 0.0
      %624 = vmatpush1.msra.mxu0 0.0
      %625 = vmatprep.subr.mxu0 0.0
      %626 = vmatpush1.msra.mxu0 0.0
      %627 = vmatprep.subr.mxu0 0.0
      %628 = vmatpush1.msra.mxu0 0.0
      %629 = vmatprep.subr.mxu0 0.0
      %630 = vmatpush1.msra.mxu0 0.0
      %631 = vmatprep.subr.mxu0 0.0
      %632 = vmatpush1.msra.mxu0 0.0
      %633 = vmatprep.subr.mxu0 0.0
      %634 = vmatpush1.msra.mxu0 0.0
      %635 = vmatprep.subr.mxu0 0.0
      %636 = vmatpush1.msra.mxu0 0.0
      %637 = vmatprep.subr.mxu0 0.0
      %638 = vmatpush1.msra.mxu0 0.0
      %639 = vmatprep.subr.mxu0 0.0
      %640 = vmatpush1.msra.mxu0 0.0
      %641 = vmatprep.subr.mxu0 0.0
      %642 = vmatpush1.msra.mxu0 0.0
      %643 = vmatprep.subr.mxu0 0.0
      %644 = vmatpush1.msra.mxu0 0.0
      %645 = vmatprep.subr.mxu0 0.0
      %646 = vmatpush1.msra.mxu0 0.0
      %647 = vmatprep.subr.mxu0 0.0
      %648 = vmatpush1.msra.mxu0 0.0
      %649 = vmatprep.subr.mxu0 0.0
      %650 = vmatpush1.msra.mxu0 0.0
      %651 = vmatprep.subr.mxu0 0.0
      %v652 = vand.u32 %v190, 4294901760
      %653 = vmatpush1.msra.mxu0 %v652
      %654 = vmatprep.subr.mxu0 0.0
      %v655 = vand.u32 %v189, 4294901760
      %656 = vmatpush1.msra.mxu0 %v655
      %657 = vmatprep.subr.mxu0 0.0
      %658 = vmatpush2.msra.mxu0 0.0
      %659 = vmatprep.subr.mxu0 0.0
      %660 = vmatpush2.msra.mxu0 0.0
      %661 = vmatprep.subr.mxu0 0.0
      %662 = vmatpush2.msra.mxu0 0.0
      %663 = vmatprep.subr.mxu0 0.0
      %664 = vmatpush2.msra.mxu0 0.0
      %665 = vmatprep.subr.mxu0 0.0
      %666 = vmatpush2.msra.mxu0 0.0
      %667 = vmatprep.subr.mxu0 0.0
      %668 = vmatpush2.msra.mxu0 0.0
      %669 = vmatprep.subr.mxu0 0.0
      %670 = vmatpush2.msra.mxu0 0.0
      %671 = vmatprep.subr.mxu0 0.0
      %672 = vmatpush2.msra.mxu0 0.0
      %673 = vmatprep.subr.mxu0 0.0
      %674 = vmatpush2.msra.mxu0 0.0
      %675 = vmatprep.subr.mxu0 0.0
      %676 = vmatpush2.msra.mxu0 0.0
      %677 = vmatprep.subr.mxu0 0.0
      %678 = vmatpush2.msra.mxu0 0.0
      %679 = vmatprep.subr.mxu0 0.0
      %680 = vmatpush2.msra.mxu0 0.0
      %681 = vmatprep.subr.mxu0 0.0
      %682 = vmatpush2.msra.mxu0 0.0
      %683 = vmatprep.subr.mxu0 0.0
      %684 = vmatpush2.msra.mxu0 0.0
      %685 = vmatprep.subr.mxu0 0.0
      %686 = vmatpush2.msra.mxu0 0.0
      %687 = vmatprep.subr.mxu0 0.0
      %688 = vmatpush2.msra.mxu0 0.0
      %689 = vmatprep.mubr.f32.mxu0 0.0
      %v690 = vand.u32 %v195, 4294901760
      %691 = vmatmul.mubr.f32.gmra.mxu0 %v690
      %v692 = vpop.f32.mrf.mxu0
      %v693 = vadd.f32 %v614, %v692
      %v694 = vpop.f32.mrf.mxu0
      %695 = vmatprep.mubr.f32.mxu0 0.0
      %v696 = vand.u32 %v198, 4294901760
      %697 = vmatmul.mubr.f32.gmra.mxu0 %v696
      %v698 = vpop.f32.mrf.mxu0
      %v699 = vadd.f32 %v620, %v698
      %v700 = vpop.f32.mrf.mxu0
      %701 = vdwg.mxu0
      %vm702 = vcmask 56320
      %703 = vst.msk [vmem:[%s187] sm:$0xff] %vm702, %v693
      %704 = vst.msk [vmem:[%s187 + $0x8] sm:$0xff] %vm702, %v699
      %s705 = smul.u32 2, %s18
      %p706 = scmp.lt.s32.totalorder %s17, 1
      %s707 = scalar_select %p706, %s17, 1
      %p708 = scmp.lt.s32.totalorder %s705, 1
      %s709 = scalar_select %p708, %s705, 1
      %s710 = smul.addr %s707, 2
      %s711 = sadd.s32 %s709, %s710
      %s712 = smul.addr %s711, 8
      %s713 = scalar_lea.vmem %s2, %s712
      // Predicated region
      $region29: #{moving_avg.1} parent=27 // pred_check
        %p714 = pneg %p97
      $region30: #{moving_avg.1} parent=27 // pred_check_branch
        %716 = sbr.rel (%p714) target = $region32
      $region31: #{moving_avg.1} parent=27 // pred_region
        %s717 = smul.u32 2, %s18
      $region32: #{moving_avg.1} parent=27 // pred_fallthru
        _
    $region28: #{moving_avg.1} parent=5 // pred_fallthru
      _
    %p718 = scmp.le.s32.totalorder 2, %s8
    // Predicated region
    $region33: #{moving_avg.1} parent=5 // pred_check
      %p719 = pneg %p718
    $region34: #{moving_avg.1} parent=5 // pred_check_branch
      %721 = sbr.rel (%p719) target = $region36
    $region35: #{moving_avg.1} parent=5 // pred_region
      %s722 = ssub.s32 %s8, 2
      // Predicated region
      $region37: #{moving_avg.1} parent=35 // pred_check
        %p723 = pneg %p103
      $region38: #{moving_avg.1} parent=35 // pred_check_branch
        %725 = sbr.rel (%p723) target = $region40
      $region39: #{moving_avg.1} parent=35 // pred_region
        %s726 = smul.u32 2, %s20
        %p727 = scmp.lt.s32.totalorder %s19, 1
        %s728 = scalar_select %p727, %s19, 1
        %p729 = scmp.lt.s32.totalorder %s726, 1
        %s730 = scalar_select %p729, %s726, 1
        %s731 = smul.addr %s728, 2
        %s732 = sadd.s32 %s730, %s731
        %s733 = smul.addr %s732, 8
        %s734 = scalar_lea.vmem %s2, %s733
      $region40: #{moving_avg.1} parent=35 // pred_fallthru
        _
    $region36: #{moving_avg.1} parent=5 // pred_fallthru
      _
  $region6: #{moving_avg.1} parent=0 // loop_footer
    %s12 = sadd.s32 1, %s8
  $region7: #{moving_avg.1} parent=0 // loop_footer_branch
    %7 = sbr.rel target = $region3
  $region8: #{moving_avg.1} parent=0 // loop_exit
    _

</llo_original>
